<compile_context>
chip_gen: v7x
topology: tpu7x:2x2x1
jax: 0.10.0
libtpu: 0.0.40
codegen_flags: <defaults>
</compile_context>

<pallas_src>
import jax
import jax.numpy as jnp
import numpy as np
from jax import lax
from jax.experimental import pallas as pl
from jax.experimental.pallas import tpu as pltpu


def _round_up(v, m):
    return ((v + m - 1) // m) * m


def _pick_tile(dim, candidates):
    for t in candidates:
        if t <= dim and dim % t == 0:
            return t
    return dim


def _pick_time_chunk(seq, target):
    """Chunk length must be a multiple of 8 (sublane-aligned y-store block)
    that divides seq; otherwise fall back to the whole sequence as one chunk."""
    t = min(target, seq)
    t -= t % 8
    while t >= 8:
        if seq % t == 0:
            return t
        t -= 8
    return seq


# ----------------------------- projection kernel -----------------------------
def matmul_bias_kernel(x_ref, w_ref, b_ref, o_ref):
    """o = x @ w + b for one (tm, tn) tile, f32 MXU accumulation."""
    o_ref[...] = (jnp.dot(x_ref[...].astype(w_ref.dtype), w_ref[...],
                          preferred_element_type=jnp.float32)
                  + b_ref[...])


def _matmul_bias(x, w, b):
    """(M,K) @ (K,N) + (1,N) -> (M,N) f32 with a real (M,N)-tiled grid."""
    M, K = x.shape
    N = w.shape[1]
    tm = _pick_tile(M, (256, 128, 64, 32, 16, 8))
    tn = _pick_tile(N, (256, 128))
    return pl.pallas_call(
        matmul_bias_kernel,
        out_shape=jax.ShapeDtypeStruct((M, N), jnp.float32),
        grid_spec=pltpu.PrefetchScalarGridSpec(
            num_scalar_prefetch=0,
            grid=(M // tm, N // tn),
            in_specs=[
                pl.BlockSpec((tm, K), lambda i, j: (i, 0)),
                pl.BlockSpec((K, tn), lambda i, j: (0, j)),
                pl.BlockSpec((1, tn), lambda i, j: (0, j)),
            ],
            out_specs=pl.BlockSpec((tm, tn), lambda i, j: (i, j)),
        ),
        compiler_params=pltpu.CompilerParams(
            dimension_semantics=("parallel", "parallel"),
            vmem_limit_bytes=32 * 1024 * 1024),
    )(x, w, b)


# ------------------------ fused recurrence + output kernel -------------------
def lstm_fused_kernel(xg_ref, whh_ref, wlin_ref, blin_ref, h0_ref, c0_ref,
                      y_ref, h_ref, c_ref):
    """One time-chunk of the LSTM recurrence with fused ReLU + Linear.

    xg_ref:   (Ts, Bp, 4Hp)  precomputed x@W_ih^T + (b_ih+b_hh); gate order
              [i, f, g, o] in lane blocks of width Hp (128-multiple -> free
              slicing).
    whh_ref:  (Hp, 4Hp)      W_hh^T, pre-transposed + zero-padded.
    wlin_ref: (Hp, Dp)       W_lin^T, pre-transposed + zero-padded.
    blin_ref: (1, Dp)        linear bias (padded).
    h0/c0:    (Bp, Hp)       initial states.
    y_ref:    (Bp, Ts, Dp)   batch-major output chunk (lane-dense stores, no
              wrapper permute afterwards).
    h_ref/c_ref: (Bp, Hp)    final states; constant block index => resident
              across chunks, they double as the h/c carry.
    """
    hp = whh_ref.shape[0]
    ts = xg_ref.shape[0]

    @pl.when(pl.program_id(0) == 0)
    def _():
        h_ref[...] = h0_ref[...]
        c_ref[...] = c0_ref[...]

    # Loop-invariant weights: load once, reuse every step.
    w_hh = whh_ref[...]
    w_lin = wlin_ref[...]
    b_lin = blin_ref[...]
    cdt = w_hh.dtype

    def step(t, carry):
        h, c = carry
        # Single fused gate matmul (1 MXU push per step instead of 4).
        gates = xg_ref[t] + jnp.dot(h.astype(cdt), w_hh,
                                    preferred_element_type=jnp.float32)
        i_g = jax.nn.sigmoid(gates[:, 0 * hp:1 * hp])
        f_g = jax.nn.sigmoid(gates[:, 1 * hp:2 * hp])
        g_g = jnp.tanh(gates[:, 2 * hp:3 * hp])
        o_g = jax.nn.sigmoid(gates[:, 3 * hp:4 * hp])
        c_new = f_g * c + i_g * g_g
        h_new = o_g * jnp.tanh(c_new)
        # Fused ReLU + Linear; does not feed h_{t+1}, so it hides under the
        # serial recurrence dependency. Lane-dense (Dp multiple of 128) store.
        y_t = jnp.dot(jnp.maximum(h_new, 0.0).astype(cdt), w_lin,
                      preferred_element_type=jnp.float32) + b_lin
        y_ref[:, pl.ds(t, 1), :] = y_t[:, None, :]
        return (h_new, c_new)

    # Bounded unroll: LLO visibility without the vreg-pressure cliff.
    h_fin, c_fin = lax.fori_loop(0, ts, step, (h_ref[...], c_ref[...]),
                                 unroll=4)
    h_ref[...] = h_fin
    c_ref[...] = c_fin


def _lstm_fused(xg, w_hh_t, w_lin_t, b_lin, h0, c0, *, time_chunk):
    S, Bp, G = xg.shape
    Hp = w_hh_t.shape[0]
    Dp = w_lin_t.shape[1]
    Ts = _pick_time_chunk(S, time_chunk)
    # TODO(synk): on v7x, add a leading 'parallel' batch grid axis (split Bp
    # across the two TensorCores) once the real batch is large enough.
    # TODO(synk): for vocabulary-sized dictLen where (Hp, Dp) w_lin won't fit
    # VMEM, fall back to a separate N-tiled projection pass over relu(h).
    return pl.pallas_call(
        lstm_fused_kernel,
        out_shape=(
            jax.ShapeDtypeStruct((Bp, S, Dp), jnp.float32),   # y, batch-major
            jax.ShapeDtypeStruct((Bp, Hp), jnp.float32),      # final hidden
            jax.ShapeDtypeStruct((Bp, Hp), jnp.float32),      # final cell
        ),
        grid_spec=pltpu.PrefetchScalarGridSpec(
            num_scalar_prefetch=0,
            grid=(S // Ts,),
            in_specs=[
                pl.BlockSpec((Ts, Bp, G), lambda s: (s, 0, 0)),
                pl.BlockSpec((Hp, G), lambda s: (0, 0)),
                pl.BlockSpec((Hp, Dp), lambda s: (0, 0)),
                pl.BlockSpec((1, Dp), lambda s: (0, 0)),
                pl.BlockSpec((Bp, Hp), lambda s: (0, 0)),
                pl.BlockSpec((Bp, Hp), lambda s: (0, 0)),
            ],
            out_specs=[
                pl.BlockSpec((Bp, Ts, Dp), lambda s: (0, s, 0)),
                pl.BlockSpec((Bp, Hp), lambda s: (0, 0)),
                pl.BlockSpec((Bp, Hp), lambda s: (0, 0)),
            ],
        ),
        compiler_params=pltpu.CompilerParams(
            dimension_semantics=("arbitrary",),   # time recurrence is serial
            vmem_limit_bytes=32 * 1024 * 1024),
    )(xg, w_hh_t, w_lin_t, b_lin, h0, c0)


# ------------------------- one-time parameter prep ---------------------------
def prepare_decoder_params(params, *, compute_dtype=jnp.float32):
    """Hoisted weight prep (transpose / gate-block padding), done once at
    parameter-load time, never per forward call.

    compute_dtype=jnp.bfloat16 enables bf16 MXU operands on v6e/v7x (keep f32
    accumulation; relax numeric tolerances to ~1e-2 if enabled).
    """
    f32 = jnp.float32
    w_ih = params["w_ih"].astype(f32)          # (4H, I)
    w_hh = params["w_hh"].astype(f32)          # (4H, H)
    b = (params["b_ih"] + params["b_hh"]).astype(f32)
    w_lin = params["w_lin"].astype(f32)        # (D, H)
    b_lin = params["b_lin"].astype(f32)        # (D,)

    four_h = w_ih.shape[0]
    H = four_h // 4
    D = w_lin.shape[0]
    Hp = _round_up(H, 128)                     # lane-dense hidden
    Dp = _round_up(D, 128)                     # lane-dense output

    def pad_gate_rows(w):                      # (4H, X) -> (4Hp, X), per gate
        w4 = w.reshape(4, H, w.shape[-1])
        return jnp.pad(w4, ((0, 0), (0, Hp - H), (0, 0))).reshape(4 * Hp, -1)

    w_ih_p = pad_gate_rows(w_ih)                                   # (4Hp, I)
    w_hh_p = jnp.pad(pad_gate_rows(w_hh), ((0, 0), (0, Hp - H)))   # (4Hp, Hp)
    b_p = jnp.pad(b.reshape(4, H), ((0, 0), (0, Hp - H))).reshape(1, 4 * Hp)

    w_lin_t = jnp.zeros((Hp, Dp), f32).at[:H, :D].set(w_lin.T)
    b_lin_p = jnp.zeros((1, Dp), f32).at[:, :D].set(b_lin)

    return {
        "w_ih_t": w_ih_p.T.astype(compute_dtype),   # (I, 4Hp)
        "b_gates": b_p,                             # (1, 4Hp) f32
        "w_hh_t": w_hh_p.T.astype(compute_dtype),   # (Hp, 4Hp)
        "w_lin_t": w_lin_t.astype(compute_dtype),   # (Hp, Dp)
        "b_lin": b_lin_p,                           # (1, Dp) f32
        "hidden": H, "dict_len": D,
    }


# ---------------------------------- wrapper ----------------------------------
def decoder_base_forward(x, h0, c0, prep, *, time_chunk=32):
    """Pallas equivalent of DecoderBase.forward.

    Args:
      x:  (S, B, I) float32, h0/c0: (1, B, H) float32,
      prep: output of prepare_decoder_params.
    Returns:
      (y (B, S, D), hidden (1, B, H), cell (1, B, H))
    """
    f32 = jnp.float32
    S, B, I = x.shape
    H, D = prep["hidden"], prep["dict_len"]
    Hp = prep["w_hh_t"].shape[0]
    Dp = prep["w_lin_t"].shape[1]
    Bp = _round_up(B, 8)                       # sublane-dense batch

    # --- 1) Hoisted input projection: one tiled (S*Bp, I) x (I, 4Hp) matmul.
    x_p = jnp.pad(x.astype(f32), ((0, 0), (0, Bp - B), (0, 0)))
    xg = _matmul_bias(x_p.reshape(S * Bp, I), prep["w_ih_t"], prep["b_gates"])
    xg = xg.reshape(S, Bp, 4 * Hp)             # free reshape, no transpose

    # --- 2) Padded initial states (padded lanes/rows stay inert / get sliced).
    h0_p = jnp.zeros((Bp, Hp), f32).at[:B, :H].set(h0[0].astype(f32))
    c0_p = jnp.zeros((Bp, Hp), f32).at[:B, :H].set(c0[0].astype(f32))

    # --- 3) Time-chunked recurrence with fused gates + ReLU + Linear.
    y_pad, h_fin, c_fin = _lstm_fused(
        xg, prep["w_hh_t"], prep["w_lin_t"], prep["b_lin"], h0_p, c0_p,
        time_chunk=time_chunk)

    y = y_pad[:B, :, :D]                       # already (B, S, D): no permute
    return y, h_fin[:B, :H][None], c_fin[:B, :H][None]


# --------------------------------- reference ---------------------------------
def decoder_base_reference(x, h0, c0, params):
    """Pure-JAX reference (lax.scan) mirroring PyTorch semantics."""
    H = h0.shape[-1]
    w_ih, w_hh = params["w_ih"], params["w_hh"]
    b = params["b_ih"] + params["b_hh"]

    def step(carry, x_t):
        h, c = carry
        gates = x_t @ w_ih.T + h @ w_hh.T + b
        i_g = jax.nn.sigmoid(gates[:, 0 * H:1 * H])
        f_g = jax.nn.sigmoid(gates[:, 1 * H:2 * H])
        g_g = jnp.tanh(gates[:, 2 * H:3 * H])
        o_g = jax.nn.sigmoid(gates[:, 3 * H:4 * H])
        c_new = f_g * c + i_g * g_g
        h_new = o_g * jnp.tanh(c_new)
        return (h_new, c_new), h_new

    (h_fin, c_fin), out = jax.lax.scan(step, (h0[0], c0[0]), x)  # (S,B,H)
    out = jnp.transpose(out, (1, 0, 2))                          # (B,S,H)
    out = jnp.maximum(out, 0.0)
    y = out @ params["w_lin"].T + params["b_lin"]
    return y, h_fin[None], c_fin[None]


if __name__ == "__main__":
    SEQ, BATCH, INPUT, HIDDEN, DICT = 16, 2, 16, 32, 64

    key = jax.random.PRNGKey(0)
    keys = jax.random.split(key, 10)

    k = 1.0 / np.sqrt(HIDDEN)
    params = {
        "w_ih": jax.random.uniform(keys[0], (4 * HIDDEN, INPUT),
                                   minval=-k, maxval=k, dtype=jnp.float32),
        "w_hh": jax.random.uniform(keys[1], (4 * HIDDEN, HIDDEN),
                                   minval=-k, maxval=k, dtype=jnp.float32),
        "b_ih": jax.random.uniform(keys[2], (4 * HIDDEN,),
                                   minval=-k, maxval=k, dtype=jnp.float32),
        "b_hh": jax.random.uniform(keys[3], (4 * HIDDEN,),
                                   minval=-k, maxval=k, dtype=jnp.float32),
        # Linear: xavier_normal_(weight, gain=1); bias keeps PyTorch default.
        "w_lin": (jax.random.normal(keys[4], (DICT, HIDDEN), dtype=jnp.float32)
                  * np.sqrt(2.0 / (HIDDEN + DICT))),
        "b_lin": jax.random.uniform(keys[5], (DICT,),
                                    minval=-k, maxval=k, dtype=jnp.float32),
    }

    x = jax.random.normal(keys[6], (SEQ, BATCH, INPUT), dtype=jnp.float32)
    h0 = jax.random.normal(keys[7], (1, BATCH, HIDDEN), dtype=jnp.float32)
    c0 = jax.random.normal(keys[8], (1, BATCH, HIDDEN), dtype=jnp.float32)

    # Weight prep hoisted out of the per-call forward (done once here).
    prep = prepare_decoder_params(params)

    # time_chunk=8 -> 2 time chunks, exercising the resident h/c carry path.
    y, hidden, cell = jax.block_until_ready(
        decoder_base_forward(x, h0, c0, prep, time_chunk=8))

    y_ref, h_ref, c_ref = decoder_base_reference(x, h0, c0, params)
    np.testing.assert_allclose(np.asarray(y), np.asarray(y_ref),
                               rtol=1e-5, atol=1e-5)
    np.testing.assert_allclose(np.asarray(hidden), np.asarray(h_ref),
                               rtol=1e-5, atol=1e-5)
    np.testing.assert_allclose(np.asarray(cell), np.asarray(c_ref),
                               rtol=1e-5, atol=1e-5)

    print("KERNEL_OK")
</pallas_src>

<mosaic_0001>
module attributes {stable_mosaic.version = 11 : i64} {
  func.func @matmul_bias_kernel(%arg0: i32, %arg1: i32, %arg2: memref<128x16xf32, #tpu.memory_space<vmem>>, %arg3: memref<16x256xf32, #tpu.memory_space<vmem>>, %arg4: memref<1x256xf32, #tpu.memory_space<vmem>>, %arg5: memref<128x256xf32, #tpu.memory_space<vmem>>) attributes {dimension_semantics = [#tpu.dimension_semantics<parallel>, #tpu.dimension_semantics<parallel>], iteration_bounds = array<i64: 1, 2>, scalar_prefetch = 0 : i64, scratch_operands = 0 : i64, tpu.core_type = #tpu.core_type<tc>, window_params = [{transform_indices = @transform_0, window_bounds = array<i64: 128, 16>}, {transform_indices = @transform_1, window_bounds = array<i64: 16, 256>}, {transform_indices = @transform_2, window_bounds = array<i64: 1, 256>}, {transform_indices = @transform_3, window_bounds = array<i64: 128, 256>}]} {
    %c0 = arith.constant 0 : index
    %c0_0 = arith.constant 0 : index
    %0 = vector.load %arg2[%c0, %c0_0] : memref<128x16xf32, #tpu.memory_space<vmem>>, vector<128x16xf32>
    %c0_1 = arith.constant 0 : index
    %c0_2 = arith.constant 0 : index
    %1 = vector.load %arg3[%c0_1, %c0_2] : memref<16x256xf32, #tpu.memory_space<vmem>>, vector<16x256xf32>
    %cst = arith.constant dense<0.000000e+00> : vector<128x256xf32>
    %2 = tpu.matmul %0, %1, %cst {dimension_numbers = #tpu.dot_dimension_numbers<[1], [0], [0], [1], [0, 0, 1, 1], [], []>} : vector<128x16xf32>, vector<16x256xf32>, vector<128x256xf32> -> vector<128x256xf32>
    %c0_3 = arith.constant 0 : index
    %c0_4 = arith.constant 0 : index
    %3 = vector.load %arg4[%c0_3, %c0_4] : memref<1x256xf32, #tpu.memory_space<vmem>>, vector<1x256xf32>
    %4 = vector.broadcast %3 : vector<1x256xf32> to vector<128x256xf32>
    %5 = arith.addf %2, %4 : vector<128x256xf32>
    %c0_5 = arith.constant 0 : index
    %c0_6 = arith.constant 0 : index
    %6 = vector.load %arg5[%c0_5, %c0_6] : memref<128x256xf32, #tpu.memory_space<vmem>>, vector<128x256xf32>
    tpu.vector_store %arg5[%c0_5, %c0_6], %5 {strides = array<i32>} : memref<128x256xf32, #tpu.memory_space<vmem>>, vector<128x256xf32>,
    return
  }
  func.func @transform_0(%arg0: i32, %arg1: i32) -> (i32, i32) {
    %c0_i32 = arith.constant 0 : i32
    %c0_i32_0 = arith.constant 0 : i32
    return %arg0, %c0_i32 : i32, i32
  }
  func.func @transform_1(%arg0: i32, %arg1: i32) -> (i32, i32) {
    %c0_i32 = arith.constant 0 : i32
    %c0_i32_0 = arith.constant 0 : i32
    return %c0_i32, %arg1 : i32, i32
  }
  func.func @transform_2(%arg0: i32, %arg1: i32) -> (i32, i32) {
    %c0_i32 = arith.constant 0 : i32
    %c0_i32_0 = arith.constant 0 : i32
    return %c0_i32, %arg1 : i32, i32
  }
  func.func @transform_3(%arg0: i32, %arg1: i32) -> (i32, i32) {
    %c0_i32 = arith.constant 0 : i32
    return %arg0, %arg1 : i32, i32
  }
}

</mosaic_0001>

<llo_original>
// kernel: tpu_custom_call.1
$region0: #{tpu_custom_call.1}
  #allocation0 [shape = 'u32[]', space=smem, size = 0x4, offset = 0x4, fixed_abs, tag = 'smem constant byte address 0x4 - core index']
  #allocation1 [shape = 'u32[144,128]{1,0:T(1,128)}', space=vmem, size = 0x12000, scoped, tag = 'internal scratch']
  %s0 = inlined_call_operand.vmem [shape: f32[128,16], index: 0, kind: input, shape index: {}]
  %s1 = inlined_call_operand.vmem [shape: f32[16,512], index: 1, kind: input, shape index: {}]
  %s2 = inlined_call_operand.vmem [shape: f32[1,512], index: 2, kind: input, shape index: {}]
  %s3 = inlined_call_operand.hbm [shape: f32[128,512], index: 3, kind: output, shape index: {}]
  %s4 = sld [smem:[#allocation0]]
  $region68: #{tpu_custom_call.1} parent=0
    _
  %s6 = ssub.s32 1, %s4
  %s7 = scalar_select 0, %s6, %s4
  $region1: #{tpu_custom_call.1} parent=0
    #allocation2 [shape = 'u8[32768]{0}', space=vmem, size = 0x8000, scoped, tag = 'input window, operand 1']
    #allocation3 [shape = 'u8[262144]{0}', space=vmem, size = 0x40000, scoped, tag = 'output window, operand 0']
    #allocation4 [shape = 's32[2]{0}', space=sflag, size = 0x8, scoped, tag = 'scoped memory for tpu_custom_call.1']
    %8 = vsyncpa [#allocation4], 0
    %s9 = scalar_lea.sflag [#allocation4], 1
    %10 = vsyncpa %s9, 0
    loop: start=0, step=1, limit=4
    $region2: #{tpu_custom_call.1} parent=1 // loop_pre_header
      _
    $region3: #{tpu_custom_call.1} parent=1 // loop_header
      %s12 = sphi 0, %s16
      %p13 = scmp.ge.s32.totalorder %s12, 4
      %s19 = sphi 0, %s31
      %s20 = sphi 0, %s27
      %s21 = sphi 0, %s19
      %s22 = sphi 0, %s20
      %s23 = sphi 0, %s21
      %s24 = sphi 0, %s22
      %s34 = sphi 0, %s36
      %s37 = sphi 0, %s34
      %s38 = sphi 0, %s37
      %s54 = sphi 0, %s38
      %s60 = sphi 0, %s62
      %s63 = sphi 0, %s60
      %s64 = sphi 0, %s63
      %s80 = sphi 0, %s64
      %s86 = sphi 0, %s88
      %s89 = sphi 0, %s86
      %s90 = sphi 0, %s89
      %s106 = sphi 0, %s90
      %s114 = sphi 0, %s116
      %s117 = sphi 0, %s114
      %s118 = sphi 0, %s117
      %s134 = sphi 0, %s118
    $region4: #{tpu_custom_call.1} parent=1 // loop_header_branch
      %15 = sbr.rel (%p13) target = $region8
    $region5: #{tpu_custom_call.1} parent=1 // loop_body
      %s17 = ssub.s32 %s12, 1
      %s18 = ssub.s32 %s12, 2
      %s25 = sadd.s32 1, %s20
      %p26 = scmp.ge.s32.totalorder %s25, 2
      %s27 = scalar_select %p26, 0, %s25
      %s28 = sadd.s32 1, %s19
      %s29 = scalar_select %p26, %s28, %s19
      %p30 = scmp.ge.s32.totalorder %s29, 1
      %s31 = scalar_select %p30, 0, %s29
      %s32 = ssub.s32 %s19, %s31
      %p33 = scmp.eq.s32.totalorder %s32, 0
      %s35 = sadd.s32 %s34, 1
      %s36 = scalar_select %p33, %s34, %s35
      %p39 = pneg %p33
      %p40 = scmp.eq.s32.totalorder %s12, 1
      %p41 = por %p39, %p40
      %p42 = scmp.ne.s32.totalorder %s34, %s37
      %p43 = scmp.eq.s32.totalorder %s12, 0
      %p44 = por %p42, %p43
      %p45 = scmp.ne.s32.totalorder %s34, %s37
      %p46 = scmp.eq.s32.totalorder %s17, 1
      %p47 = por %p45, %p46
      %p48 = scmp.ne.s32.totalorder %s37, %s38
      %p49 = scmp.eq.s32.totalorder %s17, 0
      %p50 = por %p48, %p49
      %p51 = scmp.ne.s32.totalorder %s37, %s38
      %p52 = scmp.eq.s32.totalorder %s18, 1
      %p53 = por %p51, %p52
      %p55 = scmp.ne.s32.totalorder %s38, %s54
      %p56 = scmp.eq.s32.totalorder %s18, 0
      %p57 = por %p55, %p56
      %s58 = ssub.s32 %s20, %s27
      %p59 = scmp.eq.s32.totalorder %s58, 0
      %s61 = sadd.s32 %s60, 1
      %s62 = scalar_select %p59, %s60, %s61
      %p65 = pneg %p59
      %p66 = scmp.eq.s32.totalorder %s12, 1
      %p67 = por %p65, %p66
      %p68 = scmp.ne.s32.totalorder %s60, %s63
      %p69 = scmp.eq.s32.totalorder %s12, 0
      %p70 = por %p68, %p69
      %p71 = scmp.ne.s32.totalorder %s60, %s63
      %p72 = scmp.eq.s32.totalorder %s17, 1
      %p73 = por %p71, %p72
      %p74 = scmp.ne.s32.totalorder %s63, %s64
      %p75 = scmp.eq.s32.totalorder %s17, 0
      %p76 = por %p74, %p75
      %p77 = scmp.ne.s32.totalorder %s63, %s64
      %p78 = scmp.eq.s32.totalorder %s18, 1
      %p79 = por %p77, %p78
      %p81 = scmp.ne.s32.totalorder %s64, %s80
      %p82 = scmp.eq.s32.totalorder %s18, 0
      %p83 = por %p81, %p82
      %s84 = ssub.s32 %s20, %s27
      %p85 = scmp.eq.s32.totalorder %s84, 0
      %s87 = sadd.s32 %s86, 1
      %s88 = scalar_select %p85, %s86, %s87
      %p91 = pneg %p85
      %p92 = scmp.eq.s32.totalorder %s12, 1
      %p93 = por %p91, %p92
      %p94 = scmp.ne.s32.totalorder %s86, %s89
      %p95 = scmp.eq.s32.totalorder %s12, 0
      %p96 = por %p94, %p95
      %p97 = scmp.ne.s32.totalorder %s86, %s89
      %p98 = scmp.eq.s32.totalorder %s17, 1
      %p99 = por %p97, %p98
      %p100 = scmp.ne.s32.totalorder %s89, %s90
      %p101 = scmp.eq.s32.totalorder %s17, 0
      %p102 = por %p100, %p101
      %p103 = scmp.ne.s32.totalorder %s89, %s90
      %p104 = scmp.eq.s32.totalorder %s18, 1
      %p105 = por %p103, %p104
      %p107 = scmp.ne.s32.totalorder %s90, %s106
      %p108 = scmp.eq.s32.totalorder %s18, 0
      %p109 = por %p107, %p108
      %s110 = ssub.s32 %s19, %s31
      %s111 = ssub.s32 %s20, %s27
      %s112 = sor.u32 %s110, %s111
      %p113 = scmp.eq.s32.totalorder %s112, 0
      %s115 = sadd.s32 %s114, 1
      %s116 = scalar_select %p113, %s114, %s115
      %p119 = pneg %p113
      %p120 = scmp.eq.s32.totalorder %s12, 1
      %p121 = por %p119, %p120
      %p122 = scmp.ne.s32.totalorder %s114, %s117
      %p123 = scmp.eq.s32.totalorder %s12, 0
      %p124 = por %p122, %p123
      %p125 = scmp.ne.s32.totalorder %s114, %s117
      %p126 = scmp.eq.s32.totalorder %s17, 1
      %p127 = por %p125, %p126
      %p128 = scmp.ne.s32.totalorder %s117, %s118
      %p129 = scmp.eq.s32.totalorder %s17, 0
      %p130 = por %p128, %p129
      %p131 = scmp.ne.s32.totalorder %s117, %s118
      %p132 = scmp.eq.s32.totalorder %s18, 1
      %p133 = por %p131, %p132
      %p135 = scmp.ne.s32.totalorder %s118, %s134
      %p136 = scmp.eq.s32.totalorder %s18, 0
      %p137 = por %p135, %p136
      %p138 = scmp.le.s32.totalorder 1, %s12
      %p139 = scmp.lt.s32.totalorder %s12, 3
      %p140 = pnand %p138, %p139
      %p141 = pneg %p140
      // Predicated region
      $region9: #{tpu_custom_call.1} parent=5 // pred_check
        _
      $region10: #{tpu_custom_call.1} parent=5 // pred_check_branch
        %143 = sbr.rel (%p140) target = $region12
      $region11: #{tpu_custom_call.1} parent=5 // pred_region
        %s144 = ssub.s32 %s12, 1
        // Predicated region
        $region13: #{tpu_custom_call.1} parent=11 // pred_check
          %p145 = pneg %p50
        $region14: #{tpu_custom_call.1} parent=11 // pred_check_branch
          %147 = sbr.rel (%p145) target = $region16
        $region15: #{tpu_custom_call.1} parent=11 // pred_region
          %s148 = smul.u32 16, %s21
          %p149 = scmp.lt.s32.totalorder %s148, 15
          %s150 = scalar_select %p149, %s148, 15
          %s151 = smul.addr %s150, 8
          %s152 = scalar_lea.vmem %s0, %s151
          %s153 = smul.u32 16, %s21
        $region16: #{tpu_custom_call.1} parent=11 // pred_fallthru
          _
      $region12: #{tpu_custom_call.1} parent=5 // pred_fallthru
        _
      %p154 = scmp.lt.s32.totalorder %s12, 2
      // Predicated region
      $region17: #{tpu_custom_call.1} parent=5 // pred_check
        %p155 = pneg %p154
      $region18: #{tpu_custom_call.1} parent=5 // pred_check_branch
        %157 = sbr.rel (%p155) target = $region20
      $region19: #{tpu_custom_call.1} parent=5 // pred_region
        // Predicated region
        $region21: #{tpu_custom_call.1} parent=19 // pred_check
          %p158 = pneg %p70
        $region22: #{tpu_custom_call.1} parent=19 // pred_check_branch
          %160 = sbr.rel (%p158) target = $region24
        $region23: #{tpu_custom_call.1} parent=19 // pred_region
          %s161 = sand.u32 %s60, 1
          %s162 = sand.u32 %s60, 1
          %s163 = smul.addr %s162, 32
          %s164 = scalar_lea.vmem [#allocation2], %s163
          %s165 = smul.u32 2, %s20
          %s166 = smul.addr %s165, 8
          %s167 = scalar_lea.vmem %s1, %s166
          // Predicated region
          $region25: #{tpu_custom_call.1} parent=23 // pred_check
            _
          $region26: #{tpu_custom_call.1} parent=23 // pred_check_branch
            %169 = sbr.rel (0) target = $region28
          $region27: #{tpu_custom_call.1} parent=23 // pred_region
            // Predicated region
            $region29: #{tpu_custom_call.1} parent=27 // pred_check
              _
            $region30: #{tpu_custom_call.1} parent=27 // pred_check_branch
              %171 = sbr.rel (0) target = $region32
            $region31: #{tpu_custom_call.1} parent=27 // pred_region
              loop: start=0, step=1, limit=1
              $region33: #{tpu_custom_call.1} parent=31 // loop_pre_header
                _
              $region34: #{tpu_custom_call.1} parent=31 // loop_header
                %s173 = sphi 0, %s177
                %p174 = scmp.ge.s32.totalorder %s173, 1
                %s178 = sphi %s167, %s167
                %s179 = sphi %s164, %s164
              $region35: #{tpu_custom_call.1} parent=31 // loop_header_branch
                %176 = sbr.rel (%p174) target = $region39
              $region36: #{tpu_custom_call.1} parent=31 // loop_body
                %v180 = vld [vmem:[%s178] sm:$0xff]
                %181 = vst [vmem:[%s179] sm:$0xff] %v180
                %v182 = vld [vmem:[%s178 + $0x8] sm:$0xff]
                %183 = vst [vmem:[%s179 + $0x8] sm:$0xff] %v182
                %v184 = vld [vmem:[%s178 + $0x20] sm:$0xff]
                %185 = vst [vmem:[%s179 + $0x10] sm:$0xff] %v184
                %v186 = vld [vmem:[%s178 + $0x28] sm:$0xff]
                %187 = vst [vmem:[%s179 + $0x18] sm:$0xff] %v186
              $region37: #{tpu_custom_call.1} parent=31 // loop_footer
                %s177 = sadd.s32 1, %s173
              $region38: #{tpu_custom_call.1} parent=31 // loop_footer_branch
                %172 = sbr.rel target = $region34
              $region39: #{tpu_custom_call.1} parent=31 // loop_exit
                _
            $region32: #{tpu_custom_call.1} parent=27 // pred_fallthru
              _
            // Predicated region
            $region40: #{tpu_custom_call.1} parent=27 // pred_check
              _
            $region41: #{tpu_custom_call.1} parent=27 // pred_check_branch
              %189 = sbr.rel target = $region43
            $region42: #{tpu_custom_call.1} parent=27 // pred_region
              _
            $region43: #{tpu_custom_call.1} parent=27 // pred_fallthru
              _
          $region28: #{tpu_custom_call.1} parent=23 // pred_fallthru
            _
          %190 = vnop
        $region24: #{tpu_custom_call.1} parent=19 // pred_fallthru
          _
        // Predicated region
        $region44: #{tpu_custom_call.1} parent=19 // pred_check
          %p191 = pneg %p96
        $region45: #{tpu_custom_call.1} parent=19 // pred_check_branch
          %193 = sbr.rel (%p191) target = $region47
        $region46: #{tpu_custom_call.1} parent=19 // pred_region
          %s194 = smul.u32 2, %s20
          %p195 = scmp.lt.s32.totalorder %s194, 3
          %s196 = scalar_select %p195, %s194, 3
          %s197 = scalar_lea.vmem %s2, %s196
          %s198 = smul.u32 2, %s20
        $region47: #{tpu_custom_call.1} parent=19 // pred_fallthru
          _
      $region20: #{tpu_custom_call.1} parent=5 // pred_fallthru
        _
      %p199 = scmp.le.s32.totalorder 1, %s12
      %p200 = scmp.lt.s32.totalorder %s12, 3
      %p201 = pnand %p199, %p200
      %p202 = pneg %p201
      // Predicated region
      $region48: #{tpu_custom_call.1} parent=5 // pred_check
        _
      $region49: #{tpu_custom_call.1} parent=5 // pred_check_branch
        %204 = sbr.rel (%p201) target = $region51
      $region50: #{tpu_custom_call.1} parent=5 // pred_region
        %s205 = ssub.s32 %s12, 1
        %s206 = sand.u32 %s63, 1
        %s207 = sand.u32 %s63, 1
        %s208 = smul.addr %s207, 32
        %s209 = scalar_lea.vmem [#allocation2], %s208
        // Predicated region
        $region52: #{tpu_custom_call.1} parent=50 // pred_check
          %p210 = pneg %p76
        $region53: #{tpu_custom_call.1} parent=50 // pred_check_branch
          %212 = sbr.rel (%p210) target = $region55
        $region54: #{tpu_custom_call.1} parent=50 // pred_region
          _
        $region55: #{tpu_custom_call.1} parent=50 // pred_fallthru
          _
        %s213 = smul.u32 16, %s21
        %p214 = scmp.lt.s32.totalorder %s213, 15
        %s215 = scalar_select %p214, %s213, 15
        %s216 = smul.addr %s215, 8
        %s217 = scalar_lea.vmem %s0, %s216
        %p218 = pneg %p50
        %p219 = pneg %p47
        %s220 = sand.u32 %s63, 1
        %s221 = sand.u32 %s63, 1
        %s222 = smul.addr %s221, 32
        %s223 = scalar_lea.vmem [#allocation2], %s222
        %p224 = pneg %p76
        %p225 = pneg %p73
        %s226 = smul.u32 2, %s22
        %p227 = scmp.lt.s32.totalorder %s226, 3
        %s228 = scalar_select %p227, %s226, 3
        %s229 = scalar_lea.vmem %s2, %s228
        %p230 = pneg %p102
        %p231 = pneg %p99
        %p232 = pneg %p130
        %p233 = pneg %p127
        %s234 = sand.u32 %s117, 1
        %s235 = scalar_lea.sflag [#allocation4], %s234
        %s236 = sand.u32 %s117, 1
        %s237 = smul.addr %s236, 256
        %s238 = scalar_lea.vmem [#allocation3], %s237
        %s239 = smul.u32 16, %s21
        %p240 = scmp.lt.s32.totalorder %s239, 15
        %s241 = scalar_select %p240, %s239, 15
        %s242 = smul.addr %s241, 8
        %s243 = scalar_lea.vmem %s0, %s242
        %s244 = smul.u32 16, %s21
        %s245 = smul.u32 2, %s22
        %s246 = smul.u32 2, %s22
        %p247 = scmp.lt.s32.totalorder %s246, 3
        %s248 = scalar_select %p247, %s246, 3
        %s249 = scalar_lea.vmem %s2, %s248
        %s250 = smul.u32 2, %s22
        %s251 = smul.u32 16, %s21
        %s252 = smul.u32 2, %s22
        %v253 = vld [vmem:[%s243] sm:$0xff]
        %v254 = vld [vmem:[%s243 + $0x8] sm:$0xff]
        %v255 = vld [vmem:[%s243 + $0x10] sm:$0xff]
        %v256 = vld [vmem:[%s243 + $0x18] sm:$0xff]
        %v257 = vld [vmem:[%s243 + $0x20] sm:$0xff]
        %v258 = vld [vmem:[%s243 + $0x28] sm:$0xff]
        %v259 = vld [vmem:[%s243 + $0x30] sm:$0xff]
        %v260 = vld [vmem:[%s243 + $0x38] sm:$0xff]
        %v261 = vld [vmem:[%s243 + $0x40] sm:$0xff]
        %v262 = vld [vmem:[%s243 + $0x48] sm:$0xff]
        %v263 = vld [vmem:[%s243 + $0x50] sm:$0xff]
        %v264 = vld [vmem:[%s243 + $0x58] sm:$0xff]
        %v265 = vld [vmem:[%s243 + $0x60] sm:$0xff]
        %v266 = vld [vmem:[%s243 + $0x68] sm:$0xff]
        %v267 = vld [vmem:[%s243 + $0x70] sm:$0xff]
        %v268 = vld [vmem:[%s243 + $0x78] sm:$0xff]
        %v269 = vld [vmem:[%s209] sm:$0xff]
        %v270 = vld [vmem:[%s209 + $0x8] sm:$0xff]
        %v271 = vld [vmem:[%s209 + $0x10] sm:$0xff]
        %v272 = vld [vmem:[%s209 + $0x18] sm:$0xff]
        %v273 = vld [vmem:[%s249] sm:$0x3]
        %v275 = vlaneseq
        %v276 = vshrl.u32 %v275, 7
        %v277 = vsub.s32 0, %v276
        %v278 = vrot.slane %v273, %v277
        %v279 = vlaneseq
        %v280 = vshrl.u32 %v279, 7
        %v281 = vsub.s32 1, %v280
        %v282 = vrot.slane %v273, %v281
        %vm285 = vcmask 130048
        %v287 = vsel %vm285, %v253, 0
        %v290 = vsel %vm285, %v254, 0
        %v293 = vsel %vm285, %v255, 0
        %v296 = vsel %vm285, %v256, 0
        %v299 = vsel %vm285, %v257, 0
        %v302 = vsel %vm285, %v258, 0
        %v305 = vsel %vm285, %v259, 0
        %v308 = vsel %vm285, %v260, 0
        %v311 = vsel %vm285, %v261, 0
        %v314 = vsel %vm285, %v262, 0
        %v317 = vsel %vm285, %v263, 0
        %v320 = vsel %vm285, %v264, 0
        %v323 = vsel %vm285, %v265, 0
        %v326 = vsel %vm285, %v266, 0
        %v329 = vsel %vm285, %v267, 0
        %v332 = vsel %vm285, %v268, 0
        %334 = vmatprep.subr.mxu0 %v270
        %335 = vmatpush1.msra.mxu0 %v269
        %336 = vmatprep.subr.mxu0 %v272
        %337 = vmatpush1.msra.mxu0 %v271
        %338 = vmatprep.subr.mxu0 0.0
        %339 = vmatpush1.msra.mxu0 0.0
        %340 = vmatprep.subr.mxu0 0.0
        %341 = vmatpush1.msra.mxu0 0.0
        %342 = vmatprep.subr.mxu0 0.0
        %343 = vmatpush1.msra.mxu0 0.0
        %344 = vmatprep.subr.mxu0 0.0
        %345 = vmatpush1.msra.mxu0 0.0
        %346 = vmatprep.subr.mxu0 0.0
        %347 = vmatpush1.msra.mxu0 0.0
        %348 = vmatprep.subr.mxu0 0.0
        %349 = vmatpush1.msra.mxu0 0.0
        %350 = vmatprep.subr.mxu0 0.0
        %351 = vmatpush1.msra.mxu0 0.0
        %352 = vmatprep.subr.mxu0 0.0
        %353 = vmatpush1.msra.mxu0 0.0
        %354 = vmatprep.subr.mxu0 0.0
        %355 = vmatpush1.msra.mxu0 0.0
        %356 = vmatprep.subr.mxu0 0.0
        %357 = vmatpush1.msra.mxu0 0.0
        %358 = vmatprep.subr.mxu0 0.0
        %359 = vmatpush1.msra.mxu0 0.0
        %360 = vmatprep.subr.mxu0 0.0
        %361 = vmatpush1.msra.mxu0 0.0
        %362 = vmatprep.subr.mxu0 0.0
        %363 = vmatpush1.msra.mxu0 0.0
        %364 = vmatprep.subr.mxu0 0.0
        %365 = vmatpush1.msra.mxu0 0.0
        %366 = vmatprep.subr.mxu0 0.0
        %367 = vmatpush1.msra.mxu0 0.0
        %368 = vmatprep.subr.mxu0 0.0
        %369 = vmatpush1.msra.mxu0 0.0
        %370 = vmatprep.subr.mxu0 0.0
        %371 = vmatpush1.msra.mxu0 0.0
        %372 = vmatprep.subr.mxu0 0.0
        %373 = vmatpush1.msra.mxu0 0.0
        %374 = vmatprep.subr.mxu0 0.0
        %375 = vmatpush1.msra.mxu0 0.0
        %376 = vmatprep.subr.mxu0 0.0
        %377 = vmatpush1.msra.mxu0 0.0
        %378 = vmatprep.subr.mxu0 0.0
        %379 = vmatpush1.msra.mxu0 0.0
        %380 = vmatprep.subr.mxu0 0.0
        %381 = vmatpush1.msra.mxu0 0.0
        %382 = vmatprep.subr.mxu0 0.0
        %383 = vmatpush1.msra.mxu0 0.0
        %384 = vmatprep.subr.mxu0 0.0
        %385 = vmatpush1.msra.mxu0 0.0
        %386 = vmatprep.subr.mxu0 0.0
        %387 = vmatpush1.msra.mxu0 0.0
        %388 = vmatprep.subr.mxu0 0.0
        %389 = vmatpush1.msra.mxu0 0.0
        %390 = vmatprep.subr.mxu0 0.0
        %391 = vmatpush1.msra.mxu0 0.0
        %392 = vmatprep.subr.mxu0 0.0
        %393 = vmatpush1.msra.mxu0 0.0
        %394 = vmatprep.subr.mxu0 0.0
        %395 = vmatpush1.msra.mxu0 0.0
        %396 = vmatprep.subr.mxu0 0.0
        %397 = vmatpush1.msra.mxu0 0.0
        %398 = vmatprep.mubr.f32.mxu0 0.0
        %399 = vmatmul.mubr.f32.gmra.mrb[0].mxu0 %v287
        %v400 = vpop.f32.mrb[0].mxu0
        %v401 = vadd.f32 %v278, %v400
        %v402 = vpop.f32.mrb[0].mxu0
        %v403 = vadd.f32 %v282, %v402
        %404 = vmatprep.mubr.f32.mxu0 0.0
        %405 = vmatmul.mubr.f32.gmra.mrb[0].mxu0 %v290
        %v406 = vpop.f32.mrb[0].mxu0
        %v407 = vadd.f32 %v278, %v406
        %v408 = vpop.f32.mrb[0].mxu0
        %v409 = vadd.f32 %v282, %v408
        %410 = vmatprep.mubr.f32.mxu0 0.0
        %411 = vmatmul.mubr.f32.gmra.mrb[0].mxu0 %v293
        %v412 = vpop.f32.mrb[0].mxu0
        %v413 = vadd.f32 %v278, %v412
        %v414 = vpop.f32.mrb[0].mxu0
        %v415 = vadd.f32 %v282, %v414
        %416 = vmatprep.mubr.f32.mxu0 0.0
        %417 = vmatmul.mubr.f32.gmra.mrb[0].mxu0 %v296
        %v418 = vpop.f32.mrb[0].mxu0
        %v419 = vadd.f32 %v278, %v418
        %v420 = vpop.f32.mrb[0].mxu0
        %v421 = vadd.f32 %v282, %v420
        %422 = vmatprep.mubr.f32.mxu0 0.0
        %423 = vmatmul.mubr.f32.gmra.mrb[0].mxu0 %v299
        %v424 = vpop.f32.mrb[0].mxu0
        %v425 = vadd.f32 %v278, %v424
        %v426 = vpop.f32.mrb[0].mxu0
        %v427 = vadd.f32 %v282, %v426
        %428 = vmatprep.mubr.f32.mxu0 0.0
        %429 = vmatmul.mubr.f32.gmra.mrb[0].mxu0 %v302
        %v430 = vpop.f32.mrb[0].mxu0
        %v431 = vadd.f32 %v278, %v430
        %v432 = vpop.f32.mrb[0].mxu0
        %v433 = vadd.f32 %v282, %v432
        %434 = vmatprep.mubr.f32.mxu0 0.0
        %435 = vmatmul.mubr.f32.gmra.mrb[0].mxu0 %v305
        %v436 = vpop.f32.mrb[0].mxu0
        %v437 = vadd.f32 %v278, %v436
        %v438 = vpop.f32.mrb[0].mxu0
        %v439 = vadd.f32 %v282, %v438
        %440 = vmatprep.mubr.f32.mxu0 0.0
        %441 = vmatmul.mubr.f32.gmra.mrb[0].mxu0 %v308
        %v442 = vpop.f32.mrb[0].mxu0
        %v443 = vadd.f32 %v278, %v442
        %v444 = vpop.f32.mrb[0].mxu0
        %v445 = vadd.f32 %v282, %v444
        %446 = vmatprep.mubr.f32.mxu0 0.0
        %447 = vmatmul.mubr.f32.gmra.mrb[0].mxu0 %v311
        %v448 = vpop.f32.mrb[0].mxu0
        %v449 = vadd.f32 %v278, %v448
        %v450 = vpop.f32.mrb[0].mxu0
        %v451 = vadd.f32 %v282, %v450
        %452 = vmatprep.mubr.f32.mxu0 0.0
        %453 = vmatmul.mubr.f32.gmra.mrb[0].mxu0 %v314
        %v454 = vpop.f32.mrb[0].mxu0
        %v455 = vadd.f32 %v278, %v454
        %v456 = vpop.f32.mrb[0].mxu0
        %v457 = vadd.f32 %v282, %v456
        %458 = vmatprep.mubr.f32.mxu0 0.0
        %459 = vmatmul.mubr.f32.gmra.mrb[0].mxu0 %v317
        %v460 = vpop.f32.mrb[0].mxu0
        %v461 = vadd.f32 %v278, %v460
        %v462 = vpop.f32.mrb[0].mxu0
        %v463 = vadd.f32 %v282, %v462
        %464 = vmatprep.mubr.f32.mxu0 0.0
        %465 = vmatmul.mubr.f32.gmra.mrb[0].mxu0 %v320
        %v466 = vpop.f32.mrb[0].mxu0
        %v467 = vadd.f32 %v278, %v466
        %v468 = vpop.f32.mrb[0].mxu0
        %v469 = vadd.f32 %v282, %v468
        %470 = vmatprep.mubr.f32.mxu0 0.0
        %471 = vmatmul.mubr.f32.gmra.mrb[0].mxu0 %v323
        %v472 = vpop.f32.mrb[0].mxu0
        %v473 = vadd.f32 %v278, %v472
        %v474 = vpop.f32.mrb[0].mxu0
        %v475 = vadd.f32 %v282, %v474
        %476 = vmatprep.mubr.f32.mxu0 0.0
        %477 = vmatmul.mubr.f32.gmra.mrb[0].mxu0 %v326
        %v478 = vpop.f32.mrb[0].mxu0
        %v479 = vadd.f32 %v278, %v478
        %v480 = vpop.f32.mrb[0].mxu0
        %v481 = vadd.f32 %v282, %v480
        %482 = vmatprep.mubr.f32.mxu0 0.0
        %483 = vmatmul.mubr.f32.gmra.mrb[0].mxu0 %v329
        %v484 = vpop.f32.mrb[0].mxu0
        %v485 = vadd.f32 %v278, %v484
        %v486 = vpop.f32.mrb[0].mxu0
        %v487 = vadd.f32 %v282, %v486
        %488 = vmatprep.mubr.f32.mxu0 0.0
        %489 = vmatmul.mubr.f32.gmra.mrb[0].mxu0 %v332
        %v490 = vpop.f32.mrb[0].mxu0
        %v491 = vadd.f32 %v278, %v490
        %v492 = vpop.f32.mrb[0].mxu0
        %v493 = vadd.f32 %v282, %v492
        %494 = vdwg.mxu0
        %495 = vst [vmem:[%s238] sm:$0xff] %v401
        %496 = vst [vmem:[%s238 + $0x8] sm:$0xff] %v403
        %497 = vst [vmem:[%s238 + $0x10] sm:$0xff] %v407
        %498 = vst [vmem:[%s238 + $0x18] sm:$0xff] %v409
        %499 = vst [vmem:[%s238 + $0x20] sm:$0xff] %v413
        %500 = vst [vmem:[%s238 + $0x28] sm:$0xff] %v415
        %501 = vst [vmem:[%s238 + $0x30] sm:$0xff] %v419
        %502 = vst [vmem:[%s238 + $0x38] sm:$0xff] %v421
        %503 = vst [vmem:[%s238 + $0x40] sm:$0xff] %v425
        %504 = vst [vmem:[%s238 + $0x48] sm:$0xff] %v427
        %505 = vst [vmem:[%s238 + $0x50] sm:$0xff] %v431
        %506 = vst [vmem:[%s238 + $0x58] sm:$0xff] %v433
        %507 = vst [vmem:[%s238 + $0x60] sm:$0xff] %v437
        %508 = vst [vmem:[%s238 + $0x68] sm:$0xff] %v439
        %509 = vst [vmem:[%s238 + $0x70] sm:$0xff] %v443
        %510 = vst [vmem:[%s238 + $0x78] sm:$0xff] %v445
        %511 = vst [vmem:[%s238 + $0x80] sm:$0xff] %v449
        %512 = vst [vmem:[%s238 + $0x88] sm:$0xff] %v451
        %513 = vst [vmem:[%s238 + $0x90] sm:$0xff] %v455
        %514 = vst [vmem:[%s238 + $0x98] sm:$0xff] %v457
        %515 = vst [vmem:[%s238 + $0xa0] sm:$0xff] %v461
        %516 = vst [vmem:[%s238 + $0xa8] sm:$0xff] %v463
        %517 = vst [vmem:[%s238 + $0xb0] sm:$0xff] %v467
        %518 = vst [vmem:[%s238 + $0xb8] sm:$0xff] %v469
        %519 = vst [vmem:[%s238 + $0xc0] sm:$0xff] %v473
        %520 = vst [vmem:[%s238 + $0xc8] sm:$0xff] %v475
        %521 = vst [vmem:[%s238 + $0xd0] sm:$0xff] %v479
        %522 = vst [vmem:[%s238 + $0xd8] sm:$0xff] %v481
        %523 = vst [vmem:[%s238 + $0xe0] sm:$0xff] %v485
        %524 = vst [vmem:[%s238 + $0xe8] sm:$0xff] %v487
        %525 = vst [vmem:[%s238 + $0xf0] sm:$0xff] %v491
        %526 = vst [vmem:[%s238 + $0xf8] sm:$0xff] %v493
        %s527 = sand.u32 %s117, 1
        %s528 = scalar_lea.sflag [#allocation4], %s527
        %s529 = sand.u32 %s117, 1
        %s530 = smul.addr %s529, 256
        %s531 = scalar_lea.vmem [#allocation3], %s530
        // Predicated region
        $region56: #{tpu_custom_call.1} parent=50 // pred_check
          %p532 = pneg %p127
        $region57: #{tpu_custom_call.1} parent=50 // pred_check_branch
          %534 = sbr.rel (%p532) target = $region59
        $region58: #{tpu_custom_call.1} parent=50 // pred_region
          %s535 = smul.u32 16, %s21
          %s536 = smul.u32 2, %s22
          %s538 = ssub.s32 4096, 4096
          %539 = vsyncadd %s528, %s538
          %s540 = smul.addr %s535, 4
          %s541 = sadd.s32 %s536, %s540
          %s542 = smul.addr %s541, 128
          %s543 = scalar_lea.hbm %s3, %s542
          %s544 = sshll.u32 %s531, 4
          %s545 = int_to_ptr.vmem [resolvable:$true] %s544
          %550 = dma.vmem_to_hbm [thread:$0]  %s545, 4096, %s543, %s528, 256, 512, 16
        $region59: #{tpu_custom_call.1} parent=50 // pred_fallthru
          _
      $region51: #{tpu_custom_call.1} parent=5 // pred_fallthru
        _
      %p551 = scmp.le.s32.totalorder 2, %s12
      // Predicated region
      $region60: #{tpu_custom_call.1} parent=5 // pred_check
        %p552 = pneg %p551
      $region61: #{tpu_custom_call.1} parent=5 // pred_check_branch
        %554 = sbr.rel (%p552) target = $region63
      $region62: #{tpu_custom_call.1} parent=5 // pred_region
        %s555 = ssub.s32 %s12, 2
        // Predicated region
        $region64: #{tpu_custom_call.1} parent=62 // pred_check
          %p556 = pneg %p133
        $region65: #{tpu_custom_call.1} parent=62 // pred_check_branch
          %558 = sbr.rel (%p556) target = $region67
        $region66: #{tpu_custom_call.1} parent=62 // pred_region
          %s559 = sand.u32 %s118, 1
          %s560 = scalar_lea.sflag [#allocation4], %s559
          %s561 = sand.u32 %s118, 1
          %s562 = smul.addr %s561, 256
          %s563 = scalar_lea.vmem [#allocation3], %s562
          %564 = dma.done %s560, 4096
        $region67: #{tpu_custom_call.1} parent=62 // pred_fallthru
          _
      $region63: #{tpu_custom_call.1} parent=5 // pred_fallthru
        _
    $region6: #{tpu_custom_call.1} parent=1 // loop_footer
      %s16 = sadd.s32 1, %s12
    $region7: #{tpu_custom_call.1} parent=1 // loop_footer_branch
      %11 = sbr.rel target = $region3
    $region8: #{tpu_custom_call.1} parent=1 // loop_exit
      _
    %565 = vsyncpa [#allocation4], 1
    %s566 = scalar_lea.sflag [#allocation4], 1
    %567 = vsyncpa %s566, 1

</llo_original>
